<compile_context>
chip_gen: v6e
topology: v6e:2x2x1
jax: 0.10.0
libtpu: 0.0.40
codegen_flags: <defaults>
</compile_context>

<pallas_src>
import functools

import jax
import jax.numpy as jnp
from jax.experimental import pallas as pl
from jax.experimental.pallas import tpu as pltpu

SEVERITY_FACTOR = 0.5
PRESENCE_SMOOTHING = 0.1
NUM_SEVERITY_CLASSES = 4
_FEAT = 1 + NUM_SEVERITY_CLASSES  # 5: [presence_logit, 4 severity logits]
_TGT = 2                          # [presence_label, severity_class]


def _cov3d_partials_kernel(inp_ref, tgt_ref, out_ref, *, batch):
    """Accumulate lane-wise partial sums.

    inp_ref: [5, TB]  (sublane 0 = presence logit, 1..4 = severity logits)
    tgt_ref: [2, TB]  (sublane 0 = presence label,  1 = severity class 0..4)
    out_ref: [3, TB]  row 0 = sum of presence BCE terms
                      row 1 = sum of masked severity CE terms
                      row 2 = count of severity-present samples
    """
    i = pl.program_id(0)
    tb = inp_ref.shape[-1]

    @pl.when(i == 0)
    def _():
        out_ref[...] = jnp.zeros_like(out_ref)

    x = inp_ref[...].astype(jnp.float32)   # [5, TB]
    t = tgt_ref[...].astype(jnp.float32)   # [2, TB]

    # Mask out padded tail lanes (global sample index >= true batch size).
    lane = jax.lax.broadcasted_iota(jnp.int32, (1, tb), 1) + i * tb
    valid = lane < batch                                    # [1, TB] bool
    valid_f = valid.astype(jnp.float32)

    # ---------------- presence: stable BCE-with-logits, smoothed labels -----
    z = x[0:1, :]
    y = t[0:1, :]
    smoothed = y * (1.0 - PRESENCE_SMOOTHING * 2.0) + PRESENCE_SMOOTHING
    bce = jnp.maximum(z, 0.0) - z * smoothed + jnp.log1p(jnp.exp(-jnp.abs(z)))
    out_ref[0:1, :] += bce * valid_f

    # ---------------- severity: masked cross-entropy over rows 1..4 ---------
    cls = jnp.round(t[1:2, :]).astype(jnp.int32)            # [1, TB] in 0..4
    present = jnp.logical_and(cls > 0, valid)
    mask = present.astype(jnp.float32)

    r1 = x[1:2, :]
    r2 = x[2:3, :]
    r3 = x[3:4, :]
    r4 = x[4:5, :]

    # log-sum-exp across the 4 classes via sublane-slice elementwise ops.
    m = jnp.maximum(jnp.maximum(r1, r2), jnp.maximum(r3, r4))
    sum_exp = (jnp.exp(r1 - m) + jnp.exp(r2 - m)
               + jnp.exp(r3 - m) + jnp.exp(r4 - m))
    lse = m + jnp.log(sum_exp)

    # Selected class logit via integer-compared selects (no gather, no onehot).
    selected = jnp.where(cls == 1, r1,
               jnp.where(cls == 2, r2,
               jnp.where(cls == 3, r3, r4)))
    ce = lse - selected                                     # -log_softmax[class]

    out_ref[1:2, :] += ce * mask
    out_ref[2:3, :] += mask


def cov3d_loss(inputs: jax.Array, targets: jax.Array, *, tile: int = 8192) -> jax.Array:
    """inputs: [B, 5], targets: [B, 2]. Returns scalar loss (f32)."""
    B, C = inputs.shape
    assert C == _FEAT
    assert targets.shape == (B, _TGT)

    # Lane-dense repack: feature dim on sublanes, batch on lanes.
    x_t = jnp.transpose(inputs)            # [5, B]
    t_t = jnp.transpose(targets)           # [2, B]

    # Batch tile: multiple of 128 lanes; big enough to amortize per-step overhead
    # yet tiny in VMEM even on v7x (7 * TB * 4 bytes per step, double-buffered).
    tb = max(128, min(tile, pl.cdiv(B, 128) * 128))
    bp = pl.cdiv(B, tb) * tb
    if bp != B:
        x_t = jnp.pad(x_t, ((0, 0), (0, bp - B)))
        t_t = jnp.pad(t_t, ((0, 0), (0, bp - B)))

    partials = pl.pallas_call(
        functools.partial(_cov3d_partials_kernel, batch=B),
        out_shape=jax.ShapeDtypeStruct((3, tb), jnp.float32),
        grid=(bp // tb,),
        in_specs=[
            pl.BlockSpec((_FEAT, tb), lambda i: (0, i)),
            pl.BlockSpec((_TGT, tb), lambda i: (0, i)),
        ],
        out_specs=pl.BlockSpec((3, tb), lambda i: (0, 0)),
        compiler_params=pltpu.CompilerParams(
            dimension_semantics=("arbitrary",)),
    )(x_t, t_t)

    # Tiny final reduce + weighted combine in plain JAX (one XLU pass total).
    bce_sum = jnp.sum(partials[0])
    sev_sum = jnp.sum(partials[1])
    count = jnp.sum(partials[2])

    presence_loss = bce_sum / B
    severity_loss = jnp.where(count > 0.0,
                              sev_sum / jnp.maximum(count, 1.0),
                              0.0)
    return presence_loss * (1.0 - SEVERITY_FACTOR) + SEVERITY_FACTOR * severity_loss


def cov3d_loss_ref(inputs, targets):
    """Plain-JAX reference mirroring the PyTorch forward (default config)."""
    z = inputs[:, 0:1].astype(jnp.float32)
    y = targets[:, 0:1].astype(jnp.float32)
    smoothed = y * (1.0 - PRESENCE_SMOOTHING * 2.0) + PRESENCE_SMOOTHING
    bce = jnp.maximum(z, 0.0) - z * smoothed + jnp.log1p(jnp.exp(-jnp.abs(z)))
    presence_loss = jnp.mean(bce)

    sev_logits = inputs[:, 1:].astype(jnp.float32)
    sev_class = jnp.round(targets[:, 1]).astype(jnp.int32)
    present = sev_class > 0
    log_probs = jax.nn.log_softmax(sev_logits, axis=-1)
    cls = jnp.clip(sev_class - 1, 0)
    per_sample = -jnp.take_along_axis(log_probs, cls[:, None], axis=-1)[:, 0]
    mask = present.astype(jnp.float32)
    count = jnp.sum(mask)
    severity_loss = jnp.where(count > 0,
                              jnp.sum(per_sample * mask) / jnp.maximum(count, 1.0),
                              0.0)
    return presence_loss * (1.0 - SEVERITY_FACTOR) + SEVERITY_FACTOR * severity_loss


# TODO(synk): non-default config branches (severity_everything weighted targets,
# neighbour_smoothing conv1d label smoothing, severity_regression / mse, pos_weight)
# are alternate configuration paths and are not implemented in this kernel.

if __name__ == "__main__":
    key = jax.random.PRNGKey(0)

    # (B=8, single tile) and (B=300, tile=128 -> multi-tile grid with masked tail).
    for B, tile in ((8, 8192), (300, 128)):
        k1, k2, k3, key = jax.random.split(key, 4)
        inputs = jax.random.normal(k1, (B, _FEAT), dtype=jnp.float32)
        presence = jax.random.bernoulli(k2, 0.5, (B, 1)).astype(jnp.float32)
        severity = jax.random.randint(k3, (B, 1), 0, 5).astype(jnp.float32)
        targets = jnp.concatenate([presence, severity], axis=-1)  # [B, 2]

        out = jax.block_until_ready(cov3d_loss(inputs, targets, tile=tile))
        ref = cov3d_loss_ref(inputs, targets)
        assert jnp.allclose(out, ref, rtol=1e-5, atol=1e-5), (B, out, ref)

    print("KERNEL_OK")
</pallas_src>

<mosaic_0001>
module attributes {stable_mosaic.version = 11 : i64} {
  func.func @_cov3d_partials_kernel(%arg0: i32, %arg1: memref<5x128xf32, #tpu.memory_space<vmem>>, %arg2: memref<2x128xf32, #tpu.memory_space<vmem>>, %arg3: memref<3x128xf32, #tpu.memory_space<vmem>>) attributes {dimension_semantics = [#tpu.dimension_semantics<arbitrary>], iteration_bounds = array<i64: 1>, scalar_prefetch = 0 : i64, scratch_operands = 0 : i64, tpu.core_type = #tpu.core_type<tc>, window_params = [{transform_indices = @transform_0, window_bounds = array<i64: 5, 128>}, {transform_indices = @transform_1, window_bounds = array<i64: 2, 128>}, {pipeline_mode = #tpu.pipeline_mode<synchronous>, transform_indices = @transform_2, window_bounds = array<i64: 3, 128>}]} {
    %c0_i32 = arith.constant 0 : i32
    %0 = arith.cmpi eq, %arg0, %c0_i32 : i32
    %1 = arith.extui %0 : i1 to i32
    %c0_i32_0 = arith.constant 0 : i32
    %2 = arith.cmpi ne, %1, %c0_i32_0 : i32
    scf.if %2 {
      %cst_18 = arith.constant 0.000000e+00 : f32
      %78 = vector.broadcast %cst_18 : f32 to vector<3x128xf32>
      %c0_19 = arith.constant 0 : index
      %c0_20 = arith.constant 0 : index
      %79 = vector.load %arg3[%c0_19, %c0_20] : memref<3x128xf32, #tpu.memory_space<vmem>>, vector<3x128xf32>
      tpu.vector_store %arg3[%c0_19, %c0_20], %78 {strides = array<i32>} : memref<3x128xf32, #tpu.memory_space<vmem>>, vector<3x128xf32>,
    } else {
    }
    %c0 = arith.constant 0 : index
    %c0_1 = arith.constant 0 : index
    %3 = vector.load %arg1[%c0, %c0_1] : memref<5x128xf32, #tpu.memory_space<vmem>>, vector<5x128xf32>
    %c0_2 = arith.constant 0 : index
    %c0_3 = arith.constant 0 : index
    %4 = vector.load %arg2[%c0_2, %c0_3] : memref<2x128xf32, #tpu.memory_space<vmem>>, vector<2x128xf32>
    %5 = tpu.iota {dimensions = array<i32: 1>} : vector<1x128xi32>
    %c128_i32 = arith.constant 128 : i32
    %6 = arith.muli %arg0, %c128_i32 : i32
    %7 = vector.broadcast %6 : i32 to vector<1x128xi32>
    %8 = arith.addi %5, %7 : vector<1x128xi32>
    %c8_i32 = arith.constant 8 : i32
    %9 = vector.broadcast %c8_i32 : i32 to vector<1x128xi32>
    %10 = arith.cmpi slt, %8, %9 : vector<1x128xi32>
    %11 = arith.extui %10 : vector<1x128xi1> to vector<1x128xi32>
    %12 = arith.sitofp %11 : vector<1x128xi32> to vector<1x128xf32>
    %13 = vector.extract_strided_slice %3 {offsets = [0, 0], sizes = [1, 128], strides = [1, 1]} : vector<5x128xf32> to vector<1x128xf32>
    %14 = vector.extract_strided_slice %4 {offsets = [0, 0], sizes = [1, 128], strides = [1, 1]} : vector<2x128xf32> to vector<1x128xf32>
    %cst = arith.constant 8.000000e-01 : f32
    %15 = vector.broadcast %cst : f32 to vector<1x128xf32>
    %16 = arith.mulf %14, %15 : vector<1x128xf32>
    %cst_4 = arith.constant 1.000000e-01 : f32
    %17 = vector.broadcast %cst_4 : f32 to vector<1x128xf32>
    %18 = arith.addf %16, %17 : vector<1x128xf32>
    %cst_5 = arith.constant 0.000000e+00 : f32
    %19 = vector.broadcast %cst_5 : f32 to vector<1x128xf32>
    %20 = arith.maximumf %13, %19 : vector<1x128xf32>
    %21 = arith.mulf %13, %18 : vector<1x128xf32>
    %22 = arith.subf %20, %21 : vector<1x128xf32>
    %23 = math.absf %13 : vector<1x128xf32>
    %cst_6 = arith.constant 0.000000e+00 : f32
    %24 = vector.broadcast %cst_6 : f32 to vector<1x128xf32>
    %25 = arith.subf %24, %23 : vector<1x128xf32>
    %26 = math.exp %25 : vector<1x128xf32>
    %27 = math.log1p %26 : vector<1x128xf32>
    %28 = arith.addf %22, %27 : vector<1x128xf32>
    %c0_7 = arith.constant 0 : index
    %c0_8 = arith.constant 0 : index
    %29 = vector.load %arg3[%c0_7, %c0_8] : memref<3x128xf32, #tpu.memory_space<vmem>>, vector<1x128xf32>
    %30 = arith.mulf %28, %12 : vector<1x128xf32>
    %31 = arith.addf %29, %30 : vector<1x128xf32>
    %c0_9 = arith.constant 0 : index
    %c0_10 = arith.constant 0 : index
    %32 = vector.load %arg3[%c0_9, %c0_10] : memref<3x128xf32, #tpu.memory_space<vmem>>, vector<1x128xf32>
    tpu.vector_store %arg3[%c0_9, %c0_10], %31 {strides = array<i32>} : memref<3x128xf32, #tpu.memory_space<vmem>>, vector<1x128xf32>,
    %33 = vector.extract_strided_slice %4 {offsets = [1, 0], sizes = [1, 128], strides = [1, 1]} : vector<2x128xf32> to vector<1x128xf32>
    %34 = math.roundeven %33 : vector<1x128xf32>
    %35 = arith.fptosi %34 : vector<1x128xf32> to vector<1x128xi32>
    %c0_i32_11 = arith.constant 0 : i32
    %36 = vector.broadcast %c0_i32_11 : i32 to vector<1x128xi32>
    %37 = arith.cmpi sgt, %35, %36 : vector<1x128xi32>
    %38 = arith.andi %37, %10 : vector<1x128xi1>
    %39 = arith.extui %38 : vector<1x128xi1> to vector<1x128xi32>
    %40 = arith.sitofp %39 : vector<1x128xi32> to vector<1x128xf32>
    %41 = vector.extract_strided_slice %3 {offsets = [1, 0], sizes = [1, 128], strides = [1, 1]} : vector<5x128xf32> to vector<1x128xf32>
    %42 = vector.extract_strided_slice %3 {offsets = [2, 0], sizes = [1, 128], strides = [1, 1]} : vector<5x128xf32> to vector<1x128xf32>
    %43 = vector.extract_strided_slice %3 {offsets = [3, 0], sizes = [1, 128], strides = [1, 1]} : vector<5x128xf32> to vector<1x128xf32>
    %44 = vector.extract_strided_slice %3 {offsets = [4, 0], sizes = [1, 128], strides = [1, 1]} : vector<5x128xf32> to vector<1x128xf32>
    %45 = arith.maximumf %41, %42 : vector<1x128xf32>
    %46 = arith.maximumf %43, %44 : vector<1x128xf32>
    %47 = arith.maximumf %45, %46 : vector<1x128xf32>
    %48 = arith.subf %41, %47 : vector<1x128xf32>
    %49 = math.exp %48 : vector<1x128xf32>
    %50 = arith.subf %42, %47 : vector<1x128xf32>
    %51 = math.exp %50 : vector<1x128xf32>
    %52 = arith.addf %49, %51 : vector<1x128xf32>
    %53 = arith.subf %43, %47 : vector<1x128xf32>
    %54 = math.exp %53 : vector<1x128xf32>
    %55 = arith.addf %52, %54 : vector<1x128xf32>
    %56 = arith.subf %44, %47 : vector<1x128xf32>
    %57 = math.exp %56 : vector<1x128xf32>
    %58 = arith.addf %55, %57 : vector<1x128xf32>
    %59 = math.log %58 : vector<1x128xf32>
    %60 = arith.addf %47, %59 : vector<1x128xf32>
    %c1_i32 = arith.constant 1 : i32
    %61 = vector.broadcast %c1_i32 : i32 to vector<1x128xi32>
    %62 = arith.cmpi eq, %35, %61 : vector<1x128xi32>
    %c2_i32 = arith.constant 2 : i32
    %63 = vector.broadcast %c2_i32 : i32 to vector<1x128xi32>
    %64 = arith.cmpi eq, %35, %63 : vector<1x128xi32>
    %c3_i32 = arith.constant 3 : i32
    %65 = vector.broadcast %c3_i32 : i32 to vector<1x128xi32>
    %66 = arith.cmpi eq, %35, %65 : vector<1x128xi32>
    %67 = arith.select %66, %43, %44 : vector<1x128xi1>, vector<1x128xf32>
    %68 = arith.select %64, %42, %67 : vector<1x128xi1>, vector<1x128xf32>
    %69 = arith.select %62, %41, %68 : vector<1x128xi1>, vector<1x128xf32>
    %70 = arith.subf %60, %69 : vector<1x128xf32>
    %c1 = arith.constant 1 : index
    %c0_12 = arith.constant 0 : index
    %71 = vector.load %arg3[%c1, %c0_12] : memref<3x128xf32, #tpu.memory_space<vmem>>, vector<1x128xf32>
    %72 = arith.mulf %70, %40 : vector<1x128xf32>
    %73 = arith.addf %71, %72 : vector<1x128xf32>
    %c1_13 = arith.constant 1 : index
    %c0_14 = arith.constant 0 : index
    %74 = vector.load %arg3[%c1_13, %c0_14] : memref<3x128xf32, #tpu.memory_space<vmem>>, vector<1x128xf32>
    tpu.vector_store %arg3[%c1_13, %c0_14], %73 {strides = array<i32>} : memref<3x128xf32, #tpu.memory_space<vmem>>, vector<1x128xf32>,
    %c2 = arith.constant 2 : index
    %c0_15 = arith.constant 0 : index
    %75 = vector.load %arg3[%c2, %c0_15] : memref<3x128xf32, #tpu.memory_space<vmem>>, vector<1x128xf32>
    %76 = arith.addf %75, %40 : vector<1x128xf32>
    %c2_16 = arith.constant 2 : index
    %c0_17 = arith.constant 0 : index
    %77 = vector.load %arg3[%c2_16, %c0_17] : memref<3x128xf32, #tpu.memory_space<vmem>>, vector<1x128xf32>
    tpu.vector_store %arg3[%c2_16, %c0_17], %76 {strides = array<i32>} : memref<3x128xf32, #tpu.memory_space<vmem>>, vector<1x128xf32>,
    return
  }
  func.func @transform_0(%arg0: i32) -> (i32, i32) {
    %c0_i32 = arith.constant 0 : i32
    %c0_i32_0 = arith.constant 0 : i32
    return %c0_i32, %arg0 : i32, i32
  }
  func.func @transform_1(%arg0: i32) -> (i32, i32) {
    %c0_i32 = arith.constant 0 : i32
    %c0_i32_0 = arith.constant 0 : i32
    return %c0_i32, %arg0 : i32, i32
  }
  func.func @transform_2(%arg0: i32) -> (i32, i32) {
    %c0_i32 = arith.constant 0 : i32
    %c0_i32_0 = arith.constant 0 : i32
    %c0_i32_1 = arith.constant 0 : i32
    return %c0_i32, %c0_i32_0 : i32, i32
  }
}

</mosaic_0001>

<llo_original>
// kernel: tpu_custom_call.1
$region0: #{tpu_custom_call.1}
  #allocation0 [shape = 'u32[]', space=smem, size = 0x4, offset = 0x4, fixed_abs, tag = 'smem constant byte address 0x4 - core index']
  #allocation1 [shape = 'u32[144,128]{1,0:T(1,128)}', space=vmem, size = 0x12000, scoped, tag = 'internal scratch']
  %s0 = inlined_call_operand.hbm [shape: f32[5,128], index: 0, kind: input, shape index: {}]
  %s1 = inlined_call_operand.hbm [shape: f32[2,128], index: 1, kind: input, shape index: {}]
  %s2 = inlined_call_operand.hbm [shape: f32[3,128], index: 2, kind: output, shape index: {}]
  %s3 = sld [smem:[#allocation0]]
  $region30: #{tpu_custom_call.1} parent=0
    _
  %s5 = ssub.s32 1, %s3
  %s6 = scalar_select 0, %s5, %s3
  $region1: #{tpu_custom_call.1} parent=0
    #allocation2 [shape = 'u8[4096]{0}', space=vmem, size = 0x1000, scoped, tag = 'input window, operand 0, single buffered']
    #allocation3 [shape = 's32[1]{0}', space=sflag, size = 0x4, scoped, tag = 'scoped memory for tpu_custom_call.1']
    #allocation4 [shape = 's32[1]{0}', space=sflag, size = 0x4, scoped, tag = 'scoped memory for tpu_custom_call.1']
    #allocation5 [shape = 'u8[1024]{0}', space=vmem, size = 0x400, scoped, tag = 'input window, operand 1, single buffered']
    #allocation6 [shape = 's32[1]{0}', space=sflag, size = 0x4, scoped, tag = 'scoped memory for tpu_custom_call.1']
    #allocation7 [shape = 'u8[2048]{0}', space=vmem, size = 0x800, scoped, tag = 'output window, operand 0, single buffered']
    %7 = vsyncpa [#allocation3], 0
    %8 = vsyncpa [#allocation6], 0
    %9 = vsyncpa [#allocation4], 0
    // Predicated region
    $region2: #{tpu_custom_call.1} parent=1 // pred_check
      _
    $region3: #{tpu_custom_call.1} parent=1 // pred_check_branch
      %11 = sbr.rel (0) target = $region5
    $region4: #{tpu_custom_call.1} parent=1 // pred_region
      %s13 = ssub.s32 128, 128
      %14 = vsyncadd [#allocation3], %s13
      %s16 = sshll.u32 [#allocation2], 4
      %s17 = int_to_ptr.vmem [resolvable:$true] %s16
      %19 = dma.hbm_to_vmem [thread:$0]  %s0, 128, %s17, [#allocation3]
    $region5: #{tpu_custom_call.1} parent=1 // pred_fallthru
      _
    // Predicated region
    $region6: #{tpu_custom_call.1} parent=1 // pred_check
      _
    $region7: #{tpu_custom_call.1} parent=1 // pred_check_branch
      %21 = sbr.rel (0) target = $region9
    $region8: #{tpu_custom_call.1} parent=1 // pred_region
      %s23 = ssub.s32 32, 32
      %24 = vsyncadd [#allocation6], %s23
      %s26 = sshll.u32 [#allocation5], 4
      %s27 = int_to_ptr.vmem [resolvable:$true] %s26
      %29 = dma.hbm_to_vmem [thread:$0]  %s1, 32, %s27, [#allocation6]
    $region9: #{tpu_custom_call.1} parent=1 // pred_fallthru
      _
    // Predicated region
    $region10: #{tpu_custom_call.1} parent=1 // pred_check
      _
    $region11: #{tpu_custom_call.1} parent=1 // pred_check_branch
      %31 = sbr.rel (0) target = $region13
    $region12: #{tpu_custom_call.1} parent=1 // pred_region
      %32 = dma.done [#allocation3], 128
    $region13: #{tpu_custom_call.1} parent=1 // pred_fallthru
      _
    // Predicated region
    $region14: #{tpu_custom_call.1} parent=1 // pred_check
      _
    $region15: #{tpu_custom_call.1} parent=1 // pred_check_branch
      %34 = sbr.rel (0) target = $region17
    $region16: #{tpu_custom_call.1} parent=1 // pred_region
      %35 = dma.done [#allocation6], 32
    $region17: #{tpu_custom_call.1} parent=1 // pred_fallthru
      _
    %p36 = scmp.eq.s32.totalorder 0, 0
    // Predicated region
    $region18: #{tpu_custom_call.1} parent=1 // pred_check
      %p37 = pneg %p36
    $region19: #{tpu_custom_call.1} parent=1 // pred_check_branch
      %39 = sbr.rel (%p37) target = $region21
    $region20: #{tpu_custom_call.1} parent=1 // pred_region
      %40 = vst [vmem:[#allocation7] sm:$0x7] 0.0
    $region21: #{tpu_custom_call.1} parent=1 // pred_fallthru
      _
    %v41 = vld [vmem:[#allocation2] sm:$0x1f]
    %v42 = vld [vmem:[#allocation5] sm:$0x3]
    %v43 = vlaneseq
    %v44 = vand.u32 %v43, 127
    %s45 = smul.u32 0, 128
    %v46 = vstv %s45
    %v47 = vadd.s32 %v44, %v46
    %vm48 = vcmp.lt.s32.totalorder %v47, 8
    %v49 = vsel %vm48, 1, 0
    %v50 = vcvt.s32.f32 %v49
    %v51 = vmul.f32 %v42, 0.8
    %v52 = vadd.f32 %v51, 0.1
    %v53 = vmax.f32 %v41, 0.0
    %v54 = vmul.f32 %v41, %v52
    %v55 = vsub.f32 %v53, %v54
    %v56 = vand.u32 2147483647, %v41
    %v57 = vsub.f32 0.0, %v56
    %v58 = vmul.f32 %v57, 1.442695
    %v59 = vpow.pop %v58
    %v60 = vadd.f32 %v59, 1.0
    %v61 = vlog2.pop %v60
    %v62 = vmul.f32 %v61, 0.6931472
    %v63 = vmul.f32 -0.5, %v59
    %v64 = vadd.f32 %v63, 1.0
    %v65 = vmul.f32 %v64, %v59
    %v66 = vand.u32 2147483647, %v59
    %vm67 = vcmp.lt.f32.partialorder %v66, 0.0004427343
    %v68 = vsel %vm67, %v65, %v62
    %v69 = vadd.f32 %v55, %v68
    %v70 = vld [vmem:[#allocation7] sm:$0x1]
    %v71 = vmul.f32 %v69, %v50
    %v72 = vadd.f32 %v70, %v71
    %73 = vst [vmem:[#allocation7] sm:$0x1] %v72
    %v74 = vcvt.f32.s32.ties.to.even %v42
    %vm75 = vcmp.gt.s32.totalorder %v74, 0
    %vm76 = vmand %vm75, %vm48
    %v77 = vsel %vm76, 1, 0
    %v78 = vcvt.s32.f32 %v77
    %v80 = vrot.slane %v41, 1
    %v82 = vmax.f32 %v41, %v80
    %v84 = vrot.slane %v82, 2
    %v86 = vmax.f32 %v82, %v84
    %v87 = vsub.f32 %v41, %v86
    %v88 = vmul.f32 %v87, 1.442695
    %v89 = vpow.pop %v88
    %v91 = vrot.slane %v86, 7
    %v93 = vsub.f32 %v41, %v91
    %v94 = vmul.f32 %v93, 1.442695
    %v95 = vpow.pop %v94
    %v97 = vrot.slane %v95, 1
    %v99 = vadd.f32 %v89, %v97
    %v100 = vrot.slane %v86, 6
    %v102 = vsub.f32 %v41, %v100
    %v103 = vmul.f32 %v102, 1.442695
    %v104 = vpow.pop %v103
    %v106 = vrot.slane %v104, 2
    %v108 = vadd.f32 %v99, %v106
    %v109 = vrot.slane %v86, 5
    %v111 = vsub.f32 %v41, %v109
    %v112 = vmul.f32 %v111, 1.442695
    %v113 = vpow.pop %v112
    %v115 = vrot.slane %v113, 3
    %v117 = vadd.f32 %v108, %v115
    %v118 = vlog2.pop %v117
    %v119 = vmul.f32 %v118, 0.6931472
    %v120 = vadd.f32 %v86, %v119
    %vm121 = vcmp.eq.s32.totalorder %v74, 1
    %vm122 = vcmp.eq.s32.totalorder %v74, 2
    %vm123 = vcmp.eq.s32.totalorder %v74, 3
    %v124 = vrot.slane %v41, 2
    %v126 = vrot.slane %v41, 3
    %v128 = vsel %vm123, %v124, %v126
    %v129 = vsel %vm122, %v80, %v128
    %v130 = vsel %vm121, %v41, %v129
    %v131 = vsub.f32 %v120, %v130
    %v132 = vld [vmem:[#allocation7 + $0x1] sm:$0x1]
    %v133 = vmul.f32 %v131, %v78
    %v135 = vrot.slane %v133, 1
    %v137 = vadd.f32 %v132, %v135
    %138 = vst [vmem:[#allocation7 + $0x1] sm:$0x1] %v137
    %v139 = vld [vmem:[#allocation7 + $0x2] sm:$0x1]
    %v141 = vrot.slane %v78, 1
    %v143 = vadd.f32 %v139, %v141
    %144 = vst [vmem:[#allocation7 + $0x2] sm:$0x1] %v143
    // Predicated region
    $region22: #{tpu_custom_call.1} parent=1 // pred_check
      _
    $region23: #{tpu_custom_call.1} parent=1 // pred_check_branch
      %146 = sbr.rel (0) target = $region25
    $region24: #{tpu_custom_call.1} parent=1 // pred_region
      %s148 = ssub.s32 64, 64
      %149 = vsyncadd [#allocation4], %s148
      %s151 = sshll.u32 [#allocation7], 4
      %s152 = int_to_ptr.vmem [resolvable:$true] %s151
      %154 = dma.vmem_to_hbm [thread:$0]  %s152, 64, %s2, [#allocation4]
    $region25: #{tpu_custom_call.1} parent=1 // pred_fallthru
      _
    // Predicated region
    $region26: #{tpu_custom_call.1} parent=1 // pred_check
      _
    $region27: #{tpu_custom_call.1} parent=1 // pred_check_branch
      %156 = sbr.rel (0) target = $region29
    $region28: #{tpu_custom_call.1} parent=1 // pred_region
      %157 = dma.done [#allocation4], 64
    $region29: #{tpu_custom_call.1} parent=1 // pred_fallthru
      _
    %158 = vsyncpa [#allocation3], 1
    %159 = vsyncpa [#allocation6], 1
    %160 = vsyncpa [#allocation4], 1

</llo_original>
